<compile_context>
chip_gen: v5e
topology: v5e:2x2
jax: 0.10.0
libtpu: 0.0.40
codegen_flags: <defaults>
</compile_context>

<pallas_src>
import functools

import jax
import jax.numpy as jnp
from jax.experimental import pallas as pl
from jax.experimental.pallas import tpu as pltpu


# Finite "-inf" so the first-tile rescale terms are exact zeros
# (finite * 0 == 0) instead of (-inf) * 0 == NaN.
_NEG_INIT = -1e30


# ----------------------------- kernel helpers ------------------------------

def _init_state(m_t, m_s, z_t, z_s, w_acc):
    m_t[...] = jnp.full_like(m_t, _NEG_INIT)
    m_s[...] = jnp.full_like(m_s, _NEG_INIT)
    z_t[...] = jnp.zeros_like(z_t)
    z_s[...] = jnp.zeros_like(z_s)
    w_acc[...] = jnp.zeros_like(w_acc)


def _online_update(t_tile, s_tile, m_t, m_s, z_t, z_s, w_acc, inv_tau):
    """Streaming (online-softmax) update of the fused cross-entropy stats over
    one (tile_c, tile_wh) spatial tile.

    Per row r (referenced to running maxima m_t, m_s):
      z_t = sum_j exp(inv_tau*(t_j - m_t))
      z_s = sum_j exp(inv_tau*(s_j - m_s))
      w   = sum_j exp(inv_tau*(t_j - m_t)) * (s_j - m_s)
    so that  row_loss = log(z_s) - inv_tau * w / z_t.

    t_tile / s_tile stay in their incoming dtype; exp arguments promote to f32
    (no pre-materialized scaled f32 copies) and 1/tau is folded into the exp
    argument instead of a full-tile multiply.
    """
    t_max = jnp.max(t_tile, axis=-1, keepdims=True).astype(jnp.float32)
    s_max = jnp.max(s_tile, axis=-1, keepdims=True).astype(jnp.float32)
    m_t_new = jnp.maximum(m_t[...], t_max)
    m_s_new = jnp.maximum(m_s[...], s_max)

    a_t = jnp.exp((m_t[...] - m_t_new) * inv_tau)
    a_s = jnp.exp((m_s[...] - m_s_new) * inv_tau)

    e_t = jnp.exp((t_tile - m_t_new) * inv_tau)       # (tile_c, tile_wh) f32
    s_c = s_tile - m_s_new                            # (tile_c, tile_wh) f32
    e_s = jnp.exp(s_c * inv_tau)

    # Use the *old* z_t for the m_s-shift correction, then update z_t.
    w_acc[...] = (a_t * (w_acc[...] + (m_s[...] - m_s_new) * z_t[...])
                  + jnp.sum(e_t * s_c, axis=-1, keepdims=True))
    z_t[...] = a_t * z_t[...] + jnp.sum(e_t, axis=-1, keepdims=True)
    z_s[...] = a_s * z_s[...] + jnp.sum(e_s, axis=-1, keepdims=True)
    m_t[...] = m_t_new
    m_s[...] = m_s_new


def _finalize_rows(z_t, z_s, w_acc, inv_tau):
    """Per-row loss from the streamed stats; one exact reciprocal per row."""
    row_loss = (jnp.log(z_s[...])
                - inv_tau * w_acc[...] * pl.reciprocal(z_t[...], approx=False))
    return jnp.sum(row_loss)


# --------------------------------- kernels ----------------------------------

def _ppm_conv_kernel(x_ref, w_ref, t_ref, out_ref,
                     s_acc, m_t, m_s, z_t, z_s, w_acc, *, inv_tau):
    """Conv path (in_channels != out_channels).

    Grid: (N, C_out/tile_c, WH/tile_wh, C_in/tile_k) -- reduction axes last.
    x_ref  : (1, tile_k, tile_wh)  student features, native dtype
    w_ref  : (tile_c, tile_k)      1x1-conv weight, cast to the student dtype
    t_ref  : (1, tile_c, tile_wh)  teacher features, native dtype
    out_ref: (1, 1, 1)             per-batch loss accumulator (revisited block)
    """
    c = pl.program_id(1)
    wh = pl.program_id(2)
    k = pl.program_id(3)
    last_wh = pl.num_programs(2) - 1
    last_k = pl.num_programs(3) - 1

    @pl.when((c == 0) & (wh == 0) & (k == 0))
    def _():                                     # start of a batch element
        out_ref[...] = jnp.zeros_like(out_ref)

    @pl.when((wh == 0) & (k == 0))
    def _():                                     # start of a (batch, c-tile) group
        _init_state(m_t, m_s, z_t, z_s, w_acc)

    @pl.when(k == 0)
    def _():                                     # start of the C_in contraction
        s_acc[...] = jnp.zeros_like(s_acc)

    # 1x1 conv == channel matmul on the MXU: native-dtype operands (bf16 fast
    # path when the inputs are bf16), f32 accumulation in VMEM scratch.
    s_acc[...] += jnp.dot(w_ref[...], x_ref[0],
                          preferred_element_type=jnp.float32)

    @pl.when(k == last_k)
    def _():                                     # student tile complete -> stats
        _online_update(t_ref[0], s_acc[...], m_t, m_s, z_t, z_s, w_acc, inv_tau)

    @pl.when((wh == last_wh) & (k == last_k))
    def _():                                     # all spatial tiles done
        out_ref[...] += _finalize_rows(z_t, z_s, w_acc, inv_tau)


def _ppm_noconv_kernel(s_ref, t_ref, out_ref,
                       m_t, m_s, z_t, z_s, w_acc, *, inv_tau):
    """Identity path (in_channels == out_channels): no MXU, no weight DMA.

    Grid: (N, C/tile_c, WH/tile_wh) -- spatial (softmax) axis last.
    """
    c = pl.program_id(1)
    wh = pl.program_id(2)
    last_wh = pl.num_programs(2) - 1

    @pl.when((c == 0) & (wh == 0))
    def _():
        out_ref[...] = jnp.zeros_like(out_ref)

    @pl.when(wh == 0)
    def _():
        _init_state(m_t, m_s, z_t, z_s, w_acc)

    _online_update(t_ref[0], s_ref[0], m_t, m_s, z_t, z_s, w_acc, inv_tau)

    @pl.when(wh == last_wh)
    def _():
        out_ref[...] += _finalize_rows(z_t, z_s, w_acc, inv_tau)


# ------------------------------ tiling helpers -------------------------------

def _vmem_limit_bytes():
    """~75% of the per-core VMEM capacity, clamped to [32 MiB, 100 MiB]."""
    cap = None
    try:
        info = pltpu.get_tpu_info()
        cap = getattr(info, "vmem_capacity_bytes", None)
    except Exception:
        cap = None
    if not cap:
        cap = 64 * 1024 * 1024        # conservative: v7x per-TensorCore VMEM
    return int(max(32 * 1024 * 1024, min(0.75 * float(cap), 100 * 1024 * 1024)))


def _largest_divisor_tile(total, multiple, cap):
    """Largest divisor of `total` that is a multiple of `multiple` and <= cap."""
    if total < multiple:
        return None
    t = (min(cap, total) // multiple) * multiple
    while t >= multiple:
        if total % t == 0:
            return t
        t -= multiple
    return None


def _choose_tiles(C, C_in, WH, s_itemsize, t_itemsize, budget, apply_conv):
    # Lane (softmax/WH) tile: multiple of 128, else fall back to full extent.
    tile_wh = _largest_divisor_tile(WH, 128, 2048) or WH
    # Sublane packing for the narrowest streamed dtype (8=f32, 16=bf16, 32=i8).
    pack = max(8, 32 // min(s_itemsize, t_itemsize, 4))
    # Conv contraction (K) tile, MXU aligned (256 preferred, 128 fallback).
    if apply_conv:
        tile_k = (_largest_divisor_tile(C_in, 256, 1024)
                  or _largest_divisor_tile(C_in, 128, 1024)
                  or C_in)
    else:
        tile_k = 0

    def footprint(tc):
        f = 2 * tc * tile_wh * t_itemsize            # teacher block (dbl-buffered)
        f += 5 * tc * 128 * 4                        # (tile_c,1) f32 state, lane-padded
        f += 6 * tc * tile_wh * 4                    # in-kernel f32 temporaries
        if apply_conv:
            f += 2 * tile_k * tile_wh * s_itemsize   # student (x) block
            f += 2 * tc * tile_k * s_itemsize        # 1x1-conv weight block
            f += tc * tile_wh * 4                    # f32 matmul accumulator
        else:
            f += 2 * tc * tile_wh * s_itemsize       # student block
        return f

    tile_c = _largest_divisor_tile(C, pack, 512) or C
    while tile_c > pack and footprint(tile_c) > budget:
        smaller = _largest_divisor_tile(C, pack, tile_c - pack)
        if smaller is None:
            break
        tile_c = smaller
    return tile_c, tile_wh, tile_k


# --------------------------------- wrapper -----------------------------------

def criterion_pixel_wise_loss_ppm(preds_S, preds_T, conv_weight=None, *,
                                  tau=1.0, loss_weight=1.0,
                                  in_channels=None, out_channels=None,
                                  tile_c=None, tile_wh=None, tile_k=None):
    """preds_S: (N, C_in, W, H), preds_T: (N, C, W, H) in their native dtype.
    conv_weight: (C_out, C_in) (or (C_out, C_in, 1, 1)) squeezed 1x1-conv
    kernel, only used when in_channels != out_channels. Returns f32 scalar."""
    N, C_in, W, H = preds_S.shape
    WH = W * H
    inv_tau = float(1.0 / tau)

    apply_conv = (in_channels != out_channels)
    C = preds_T.shape[1] if apply_conv else C_in

    # Generation-aware VMEM budget drives both tiling and the scoped limit.
    vmem_limit = _vmem_limit_bytes()
    s_item = jnp.dtype(preds_S.dtype).itemsize
    t_item = jnp.dtype(preds_T.dtype).itemsize
    auto_c, auto_wh, auto_k = _choose_tiles(C, C_in, WH, s_item, t_item,
                                            vmem_limit // 2, apply_conv)
    tile_c = int(tile_c) if tile_c else auto_c
    tile_wh = int(tile_wh) if tile_wh else auto_wh
    tile_k = (int(tile_k) if tile_k else auto_k) if apply_conv else 0
    assert C % tile_c == 0 and WH % tile_wh == 0, (C, tile_c, WH, tile_wh)

    # NOTE: when W*H is not a multiple of 128 we fall back to a full-extent
    # lane block and rely on Mosaic's masked reductions for the padded tail.
    # TODO(synk): interpret-mode check for non-128-multiple W*H shapes.

    t = preds_T.reshape(N, C, WH)                       # native dtype, no upcast
    out_shape = jax.ShapeDtypeStruct((N, 1, 1), jnp.float32)
    state = [pltpu.VMEM((tile_c, 1), jnp.float32)] * 5  # m_t, m_s, z_t, z_s, w

    if apply_conv:
        assert conv_weight is not None
        assert C_in % tile_k == 0, (C_in, tile_k)
        w2 = conv_weight
        if w2.ndim == 4:
            w2 = w2.reshape(w2.shape[0], w2.shape[1])
        # Native-dtype MXU operands (bf16 fast path); 1/tau kept out of the
        # (possibly bf16) weight and applied exactly in the exp / finalize.
        w2 = w2.astype(preds_S.dtype)
        x = preds_S.reshape(N, C_in, WH)                # native dtype, no upcast

        grid = (N, C // tile_c, WH // tile_wh, C_in // tile_k)
        kernel = functools.partial(_ppm_conv_kernel, inv_tau=inv_tau)
        in_specs = [
            # x is re-streamed once per c-tile (reduction axes last preserve
            # teacher/output residency); w once per wh-tile; t exactly once.
            pl.BlockSpec((1, tile_k, tile_wh), lambda n, c, wh, k: (n, k, wh)),
            pl.BlockSpec((tile_c, tile_k),     lambda n, c, wh, k: (c, k)),
            pl.BlockSpec((1, tile_c, tile_wh), lambda n, c, wh, k: (n, c, wh)),
        ]
        out_spec = pl.BlockSpec((1, 1, 1), lambda n, c, wh, k: (n, 0, 0))
        args = (x, w2, t)
        scratch = [pltpu.VMEM((tile_c, tile_wh), jnp.float32)] + state
        sem = ("parallel", "arbitrary", "arbitrary", "arbitrary")
    else:
        s = preds_S.reshape(N, C, WH)                   # native dtype, no upcast
        grid = (N, C // tile_c, WH // tile_wh)
        kernel = functools.partial(_ppm_noconv_kernel, inv_tau=inv_tau)
        in_specs = [
            pl.BlockSpec((1, tile_c, tile_wh), lambda n, c, wh: (n, c, wh)),
            pl.BlockSpec((1, tile_c, tile_wh), lambda n, c, wh: (n, c, wh)),
        ]
        out_spec = pl.BlockSpec((1, 1, 1), lambda n, c, wh: (n, 0, 0))
        args = (s, t)
        scratch = state
        sem = ("parallel", "arbitrary", "arbitrary")

    per_batch = pl.pallas_call(
        kernel,
        out_shape=out_shape,
        grid=grid,
        in_specs=in_specs,
        out_specs=out_spec,
        scratch_shapes=scratch,
        compiler_params=pltpu.CompilerParams(
            dimension_semantics=sem,
            vmem_limit_bytes=vmem_limit),
    )(*args)

    total = jnp.sum(per_batch)
    return (loss_weight / (C * N)) * total


# -------------------------------- reference ----------------------------------

def _reference_loss(preds_S, preds_T, conv_weight, *, tau, loss_weight,
                    in_channels, out_channels):
    """Pure-JAX reference mirroring the PyTorch forward (f32 math)."""
    if in_channels != out_channels:
        w = conv_weight
        if w.ndim == 4:
            w = w.reshape(w.shape[0], w.shape[1])
        preds_S = jnp.einsum('oc,nchw->nohw', w, preds_S,
                             preferred_element_type=jnp.float32)
    N, C, W, H = preds_S.shape
    s = preds_S.reshape(-1, W * H).astype(jnp.float32) / tau
    t = preds_T.reshape(-1, W * H).astype(jnp.float32) / tau
    soft_t = jax.nn.softmax(t, axis=1)
    logsoft_s = jax.nn.log_softmax(s, axis=1)
    loss = jnp.sum(-soft_t * logsoft_s)
    return loss_weight * loss / (C * N)


# ---------------------------------- tests ------------------------------------

if __name__ == "__main__":
    key = jax.random.PRNGKey(0)
    ks = jax.random.split(key, 10)
    tau, lw = 2.0, 0.5

    def check(got, want, rtol, atol, name):
        got = jax.block_until_ready(got)
        want = jax.block_until_ready(want)
        assert jnp.allclose(got, want, rtol, atol), (name, got, want)

    # 1) conv path, spec-sized shapes, auto tiling (degenerate 1x1x1 tiles).
    N, C_in, C_out, W, H = 2, 4, 8, 16, 16
    pS = jax.random.normal(ks[0], (N, C_in, W, H), jnp.float32)
    pT = jax.random.normal(ks[1], (N, C_out, W, H), jnp.float32)
    bound = 1.0 / float(C_in) ** 0.5
    wt = jax.random.uniform(ks[2], (C_out, C_in), jnp.float32, -bound, bound)
    got = criterion_pixel_wise_loss_ppm(pS, pT, wt, tau=tau, loss_weight=lw,
                                        in_channels=C_in, out_channels=C_out)
    want = _reference_loss(pS, pT, wt, tau=tau, loss_weight=lw,
                           in_channels=C_in, out_channels=C_out)
    check(got, want, 1e-4, 1e-5, "conv-auto")

    # 2) conv path with forced C/WH/K tiling (exercises streaming + K accum).
    N, C_in, C_out, W, H = 2, 256, 16, 16, 16
    pS = jax.random.normal(ks[3], (N, C_in, W, H), jnp.float32)
    pT = jax.random.normal(ks[4], (N, C_out, W, H), jnp.float32)
    bound = 1.0 / float(C_in) ** 0.5
    wt = jax.random.uniform(ks[5], (C_out, C_in), jnp.float32, -bound, bound)
    got = criterion_pixel_wise_loss_ppm(pS, pT, wt, tau=tau, loss_weight=lw,
                                        in_channels=C_in, out_channels=C_out,
                                        tile_c=8, tile_wh=128, tile_k=128)
    want = _reference_loss(pS, pT, wt, tau=tau, loss_weight=lw,
                           in_channels=C_in, out_channels=C_out)
    check(got, want, 1e-4, 1e-5, "conv-tiled")

    # 3) identity path with forced C/WH tiling (online-softmax streaming).
    N, C, W, H = 2, 16, 16, 16
    pS = jax.random.normal(ks[6], (N, C, W, H), jnp.float32)
    pT = jax.random.normal(ks[7], (N, C, W, H), jnp.float32)
    got = criterion_pixel_wise_loss_ppm(pS, pT, None, tau=tau, loss_weight=lw,
                                        in_channels=C, out_channels=C,
                                        tile_c=8, tile_wh=128)
    want = _reference_loss(pS, pT, None, tau=tau, loss_weight=lw,
                           in_channels=C, out_channels=C)
    check(got, want, 1e-4, 1e-5, "identity-tiled")

    # 4) conv path, bf16 inputs: native-dtype MXU operands, f32 accumulation.
    N, C_in, C_out, W, H = 2, 256, 32, 16, 16
    pS = jax.random.normal(ks[8], (N, C_in, W, H), jnp.bfloat16)
    pT = jax.random.normal(ks[9], (N, C_out, W, H), jnp.bfloat16)
    bound = 1.0 / float(C_in) ** 0.5
    wt = jax.random.uniform(ks[2], (C_out, C_in), jnp.float32,
                            -bound, bound).astype(jnp.bfloat16)
    got = criterion_pixel_wise_loss_ppm(pS, pT, wt, tau=tau, loss_weight=lw,
                                        in_channels=C_in, out_channels=C_out,
                                        tile_c=16, tile_wh=128, tile_k=128)
    want = _reference_loss(pS, pT, wt, tau=tau, loss_weight=lw,
                           in_channels=C_in, out_channels=C_out)
    check(got, want, 5e-3, 1e-4, "conv-bf16")

    print("KERNEL_OK")
</pallas_src>

<mosaic_0001>
module attributes {stable_mosaic.version = 11 : i64} {
  func.func @_ppm_conv_kernel(%arg0: i32, %arg1: i32, %arg2: i32, %arg3: i32, %arg4: memref<1x4x256xf32, #tpu.memory_space<vmem>>, %arg5: memref<8x4xf32, #tpu.memory_space<vmem>>, %arg6: memref<1x8x256xf32, #tpu.memory_space<vmem>>, %arg7: memref<1x1x1xf32, #tpu.memory_space<vmem>>, %arg8: memref<8x256xf32, #tpu.memory_space<vmem>>, %arg9: memref<8x1xf32, #tpu.memory_space<vmem>>, %arg10: memref<8x1xf32, #tpu.memory_space<vmem>>, %arg11: memref<8x1xf32, #tpu.memory_space<vmem>>, %arg12: memref<8x1xf32, #tpu.memory_space<vmem>>, %arg13: memref<8x1xf32, #tpu.memory_space<vmem>>) attributes {dimension_semantics = [#tpu.dimension_semantics<parallel>, #tpu.dimension_semantics<arbitrary>, #tpu.dimension_semantics<arbitrary>, #tpu.dimension_semantics<arbitrary>], iteration_bounds = array<i64: 2, 1, 1, 1>, scalar_prefetch = 0 : i64, scratch_operands = 6 : i64, tpu.core_type = #tpu.core_type<tc>, window_params = [{transform_indices = @transform_0, window_bounds = array<i64: 1, 4, 256>}, {transform_indices = @transform_1, window_bounds = array<i64: 8, 4>}, {transform_indices = @transform_2, window_bounds = array<i64: 1, 8, 256>}, {transform_indices = @transform_3, window_bounds = array<i64: 1, 1, 1>}]} {
    %c0_i32 = arith.constant 0 : i32
    %0 = arith.cmpi eq, %arg1, %c0_i32 : i32
    %c0_i32_0 = arith.constant 0 : i32
    %1 = arith.cmpi eq, %arg2, %c0_i32_0 : i32
    %2 = arith.andi %0, %1 : i1
    %c0_i32_1 = arith.constant 0 : i32
    %3 = arith.cmpi eq, %arg3, %c0_i32_1 : i32
    %4 = arith.andi %2, %3 : i1
    %5 = arith.extui %4 : i1 to i32
    %c0_i32_2 = arith.constant 0 : i32
    %6 = arith.cmpi ne, %5, %c0_i32_2 : i32
    scf.if %6 {
      %cst_21 = arith.constant 0.000000e+00 : f32
      %30 = vector.broadcast %cst_21 : f32 to vector<1x1x1xf32>
      %c0_22 = arith.constant 0 : index
      %c0_23 = arith.constant 0 : index
      %c0_24 = arith.constant 0 : index
      %31 = vector.load %arg7[%c0_22, %c0_23, %c0_24] : memref<1x1x1xf32, #tpu.memory_space<vmem>>, vector<1x1x1xf32>
      tpu.vector_store %arg7[%c0_22, %c0_23, %c0_24], %30 {strides = array<i32>} : memref<1x1x1xf32, #tpu.memory_space<vmem>>, vector<1x1x1xf32>,
    } else {
    }
    %c0_i32_3 = arith.constant 0 : i32
    %7 = arith.cmpi eq, %arg2, %c0_i32_3 : i32
    %c0_i32_4 = arith.constant 0 : i32
    %8 = arith.cmpi eq, %arg3, %c0_i32_4 : i32
    %9 = arith.andi %7, %8 : i1
    %10 = arith.extui %9 : i1 to i32
    %c0_i32_5 = arith.constant 0 : i32
    %11 = arith.cmpi ne, %10, %c0_i32_5 : i32
    scf.if %11 {
      %cst_21 = arith.constant -1.000000e+30 : f32
      %30 = vector.broadcast %cst_21 : f32 to vector<8x1xf32>
      %c0_22 = arith.constant 0 : index
      %c0_23 = arith.constant 0 : index
      %31 = vector.load %arg9[%c0_22, %c0_23] : memref<8x1xf32, #tpu.memory_space<vmem>>, vector<8x1xf32>
      tpu.vector_store %arg9[%c0_22, %c0_23], %30 {strides = array<i32>} : memref<8x1xf32, #tpu.memory_space<vmem>>, vector<8x1xf32>,
      %cst_24 = arith.constant -1.000000e+30 : f32
      %32 = vector.broadcast %cst_24 : f32 to vector<8x1xf32>
      %c0_25 = arith.constant 0 : index
      %c0_26 = arith.constant 0 : index
      %33 = vector.load %arg10[%c0_25, %c0_26] : memref<8x1xf32, #tpu.memory_space<vmem>>, vector<8x1xf32>
      tpu.vector_store %arg10[%c0_25, %c0_26], %32 {strides = array<i32>} : memref<8x1xf32, #tpu.memory_space<vmem>>, vector<8x1xf32>,
      %cst_27 = arith.constant 0.000000e+00 : f32
      %34 = vector.broadcast %cst_27 : f32 to vector<8x1xf32>
      %c0_28 = arith.constant 0 : index
      %c0_29 = arith.constant 0 : index
      %35 = vector.load %arg11[%c0_28, %c0_29] : memref<8x1xf32, #tpu.memory_space<vmem>>, vector<8x1xf32>
      tpu.vector_store %arg11[%c0_28, %c0_29], %34 {strides = array<i32>} : memref<8x1xf32, #tpu.memory_space<vmem>>, vector<8x1xf32>,
      %cst_30 = arith.constant 0.000000e+00 : f32
      %36 = vector.broadcast %cst_30 : f32 to vector<8x1xf32>
      %c0_31 = arith.constant 0 : index
      %c0_32 = arith.constant 0 : index
      %37 = vector.load %arg12[%c0_31, %c0_32] : memref<8x1xf32, #tpu.memory_space<vmem>>, vector<8x1xf32>
      tpu.vector_store %arg12[%c0_31, %c0_32], %36 {strides = array<i32>} : memref<8x1xf32, #tpu.memory_space<vmem>>, vector<8x1xf32>,
      %cst_33 = arith.constant 0.000000e+00 : f32
      %38 = vector.broadcast %cst_33 : f32 to vector<8x1xf32>
      %c0_34 = arith.constant 0 : index
      %c0_35 = arith.constant 0 : index
      %39 = vector.load %arg13[%c0_34, %c0_35] : memref<8x1xf32, #tpu.memory_space<vmem>>, vector<8x1xf32>
      tpu.vector_store %arg13[%c0_34, %c0_35], %38 {strides = array<i32>} : memref<8x1xf32, #tpu.memory_space<vmem>>, vector<8x1xf32>,
    } else {
    }
    %c0_i32_6 = arith.constant 0 : i32
    %12 = arith.cmpi eq, %arg3, %c0_i32_6 : i32
    %13 = arith.extui %12 : i1 to i32
    %c0_i32_7 = arith.constant 0 : i32
    %14 = arith.cmpi ne, %13, %c0_i32_7 : i32
    scf.if %14 {
      %cst_21 = arith.constant 0.000000e+00 : f32
      %30 = vector.broadcast %cst_21 : f32 to vector<8x256xf32>
      %c0_22 = arith.constant 0 : index
      %c0_23 = arith.constant 0 : index
      %31 = vector.load %arg8[%c0_22, %c0_23] : memref<8x256xf32, #tpu.memory_space<vmem>>, vector<8x256xf32>
      tpu.vector_store %arg8[%c0_22, %c0_23], %30 {strides = array<i32>} : memref<8x256xf32, #tpu.memory_space<vmem>>, vector<8x256xf32>,
    } else {
    }
    %c0 = arith.constant 0 : index
    %c0_8 = arith.constant 0 : index
    %15 = vector.load %arg8[%c0, %c0_8] : memref<8x256xf32, #tpu.memory_space<vmem>>, vector<8x256xf32>
    %c0_9 = arith.constant 0 : index
    %c0_10 = arith.constant 0 : index
    %16 = vector.load %arg5[%c0_9, %c0_10] : memref<8x4xf32, #tpu.memory_space<vmem>>, vector<8x4xf32>
    %c0_11 = arith.constant 0 : index
    %c0_12 = arith.constant 0 : index
    %c0_13 = arith.constant 0 : index
    %17 = vector.load %arg4[%c0_11, %c0_12, %c0_13] : memref<1x4x256xf32, #tpu.memory_space<vmem>>, vector<1x4x256xf32>
    %18 = vector.shape_cast %17 : vector<1x4x256xf32> to vector<4x256xf32>
    %cst = arith.constant dense<0.000000e+00> : vector<8x256xf32>
    %19 = tpu.matmul %16, %18, %cst {dimension_numbers = #tpu.dot_dimension_numbers<[1], [0], [0], [1], [0, 0, 1, 1], [], []>} : vector<8x4xf32>, vector<4x256xf32>, vector<8x256xf32> -> vector<8x256xf32>
    %20 = arith.addf %15, %19 : vector<8x256xf32>
    %c0_14 = arith.constant 0 : index
    %c0_15 = arith.constant 0 : index
    %21 = vector.load %arg8[%c0_14, %c0_15] : memref<8x256xf32, #tpu.memory_space<vmem>>, vector<8x256xf32>
    tpu.vector_store %arg8[%c0_14, %c0_15], %20 {strides = array<i32>} : memref<8x256xf32, #tpu.memory_space<vmem>>, vector<8x256xf32>,
    %c0_i32_16 = arith.constant 0 : i32
    %22 = arith.cmpi eq, %arg3, %c0_i32_16 : i32
    %23 = arith.extui %22 : i1 to i32
    %c0_i32_17 = arith.constant 0 : i32
    %24 = arith.cmpi ne, %23, %c0_i32_17 : i32
    scf.if %24 {
      %c0_21 = arith.constant 0 : index
      %c0_22 = arith.constant 0 : index
      %c0_23 = arith.constant 0 : index
      %30 = vector.load %arg6[%c0_21, %c0_22, %c0_23] : memref<1x8x256xf32, #tpu.memory_space<vmem>>, vector<1x8x256xf32>
      %31 = vector.shape_cast %30 : vector<1x8x256xf32> to vector<8x256xf32>
      %c0_24 = arith.constant 0 : index
      %c0_25 = arith.constant 0 : index
      %32 = vector.load %arg8[%c0_24, %c0_25] : memref<8x256xf32, #tpu.memory_space<vmem>>, vector<8x256xf32>
      %cst_26 = arith.constant dense<0xFF800000> : vector<8xf32>
      %33 = vector.multi_reduction <maximumf>, %31, %cst_26 [1] : vector<8x256xf32> to vector<8xf32>
      %34 = vector.shape_cast %33 : vector<8xf32> to vector<8x1xf32>
      %cst_27 = arith.constant dense<0xFF800000> : vector<8xf32>
      %35 = vector.multi_reduction <maximumf>, %32, %cst_27 [1] : vector<8x256xf32> to vector<8xf32>
      %36 = vector.shape_cast %35 : vector<8xf32> to vector<8x1xf32>
      %c0_28 = arith.constant 0 : index
      %c0_29 = arith.constant 0 : index
      %37 = vector.load %arg9[%c0_28, %c0_29] : memref<8x1xf32, #tpu.memory_space<vmem>>, vector<8x1xf32>
      %38 = arith.maximumf %37, %34 : vector<8x1xf32>
      %c0_30 = arith.constant 0 : index
      %c0_31 = arith.constant 0 : index
      %39 = vector.load %arg10[%c0_30, %c0_31] : memref<8x1xf32, #tpu.memory_space<vmem>>, vector<8x1xf32>
      %40 = arith.maximumf %39, %36 : vector<8x1xf32>
      %c0_32 = arith.constant 0 : index
      %c0_33 = arith.constant 0 : index
      %41 = vector.load %arg9[%c0_32, %c0_33] : memref<8x1xf32, #tpu.memory_space<vmem>>, vector<8x1xf32>
      %42 = arith.subf %41, %38 : vector<8x1xf32>
      %cst_34 = arith.constant 5.000000e-01 : f32
      %43 = vector.broadcast %cst_34 : f32 to vector<8x1xf32>
      %44 = arith.mulf %42, %43 : vector<8x1xf32>
      %45 = math.exp %44 : vector<8x1xf32>
      %c0_35 = arith.constant 0 : index
      %c0_36 = arith.constant 0 : index
      %46 = vector.load %arg10[%c0_35, %c0_36] : memref<8x1xf32, #tpu.memory_space<vmem>>, vector<8x1xf32>
      %47 = arith.subf %46, %40 : vector<8x1xf32>
      %cst_37 = arith.constant 5.000000e-01 : f32
      %48 = vector.broadcast %cst_37 : f32 to vector<8x1xf32>
      %49 = arith.mulf %47, %48 : vector<8x1xf32>
      %50 = math.exp %49 : vector<8x1xf32>
      %51 = vector.broadcast %38 : vector<8x1xf32> to vector<8x256xf32>
      %52 = arith.subf %31, %51 : vector<8x256xf32>
      %cst_38 = arith.constant 5.000000e-01 : f32
      %53 = vector.broadcast %cst_38 : f32 to vector<8x256xf32>
      %54 = arith.mulf %52, %53 : vector<8x256xf32>
      %55 = math.exp %54 : vector<8x256xf32>
      %56 = vector.broadcast %40 : vector<8x1xf32> to vector<8x256xf32>
      %57 = arith.subf %32, %56 : vector<8x256xf32>
      %cst_39 = arith.constant 5.000000e-01 : f32
      %58 = vector.broadcast %cst_39 : f32 to vector<8x256xf32>
      %59 = arith.mulf %57, %58 : vector<8x256xf32>
      %60 = math.exp %59 : vector<8x256xf32>
      %c0_40 = arith.constant 0 : index
      %c0_41 = arith.constant 0 : index
      %61 = vector.load %arg13[%c0_40, %c0_41] : memref<8x1xf32, #tpu.memory_space<vmem>>, vector<8x1xf32>
      %c0_42 = arith.constant 0 : index
      %c0_43 = arith.constant 0 : index
      %62 = vector.load %arg10[%c0_42, %c0_43] : memref<8x1xf32, #tpu.memory_space<vmem>>, vector<8x1xf32>
      %63 = arith.subf %62, %40 : vector<8x1xf32>
      %c0_44 = arith.constant 0 : index
      %c0_45 = arith.constant 0 : index
      %64 = vector.load %arg11[%c0_44, %c0_45] : memref<8x1xf32, #tpu.memory_space<vmem>>, vector<8x1xf32>
      %65 = arith.mulf %63, %64 : vector<8x1xf32>
      %66 = arith.addf %61, %65 : vector<8x1xf32>
      %67 = arith.mulf %45, %66 : vector<8x1xf32>
      %68 = arith.mulf %55, %57 : vector<8x256xf32>
      %cst_46 = arith.constant dense<0.000000e+00> : vector<8xf32>
      %69 = vector.multi_reduction <add>, %68, %cst_46 [1] : vector<8x256xf32> to vector<8xf32>
      %70 = vector.shape_cast %69 : vector<8xf32> to vector<8x1xf32>
      %71 = arith.addf %67, %70 : vector<8x1xf32>
      %c0_47 = arith.constant 0 : index
      %c0_48 = arith.constant 0 : index
      %72 = vector.load %arg13[%c0_47, %c0_48] : memref<8x1xf32, #tpu.memory_space<vmem>>, vector<8x1xf32>
      tpu.vector_store %arg13[%c0_47, %c0_48], %71 {strides = array<i32>} : memref<8x1xf32, #tpu.memory_space<vmem>>, vector<8x1xf32>,
      %c0_49 = arith.constant 0 : index
      %c0_50 = arith.constant 0 : index
      %73 = vector.load %arg11[%c0_49, %c0_50] : memref<8x1xf32, #tpu.memory_space<vmem>>, vector<8x1xf32>
      %74 = arith.mulf %45, %73 : vector<8x1xf32>
      %cst_51 = arith.constant dense<0.000000e+00> : vector<8xf32>
      %75 = vector.multi_reduction <add>, %55, %cst_51 [1] : vector<8x256xf32> to vector<8xf32>
      %76 = vector.shape_cast %75 : vector<8xf32> to vector<8x1xf32>
      %77 = arith.addf %74, %76 : vector<8x1xf32>
      %c0_52 = arith.constant 0 : index
      %c0_53 = arith.constant 0 : index
      %78 = vector.load %arg11[%c0_52, %c0_53] : memref<8x1xf32, #tpu.memory_space<vmem>>, vector<8x1xf32>
      tpu.vector_store %arg11[%c0_52, %c0_53], %77 {strides = array<i32>} : memref<8x1xf32, #tpu.memory_space<vmem>>, vector<8x1xf32>,
      %c0_54 = arith.constant 0 : index
      %c0_55 = arith.constant 0 : index
      %79 = vector.load %arg12[%c0_54, %c0_55] : memref<8x1xf32, #tpu.memory_space<vmem>>, vector<8x1xf32>
      %80 = arith.mulf %50, %79 : vector<8x1xf32>
      %cst_56 = arith.constant dense<0.000000e+00> : vector<8xf32>
      %81 = vector.multi_reduction <add>, %60, %cst_56 [1] : vector<8x256xf32> to vector<8xf32>
      %82 = vector.shape_cast %81 : vector<8xf32> to vector<8x1xf32>
      %83 = arith.addf %80, %82 : vector<8x1xf32>
      %c0_57 = arith.constant 0 : index
      %c0_58 = arith.constant 0 : index
      %84 = vector.load %arg12[%c0_57, %c0_58] : memref<8x1xf32, #tpu.memory_space<vmem>>, vector<8x1xf32>
      tpu.vector_store %arg12[%c0_57, %c0_58], %83 {strides = array<i32>} : memref<8x1xf32, #tpu.memory_space<vmem>>, vector<8x1xf32>,
      %c0_59 = arith.constant 0 : index
      %c0_60 = arith.constant 0 : index
      %85 = vector.load %arg9[%c0_59, %c0_60] : memref<8x1xf32, #tpu.memory_space<vmem>>, vector<8x1xf32>
      tpu.vector_store %arg9[%c0_59, %c0_60], %38 {strides = array<i32>} : memref<8x1xf32, #tpu.memory_space<vmem>>, vector<8x1xf32>,
      %c0_61 = arith.constant 0 : index
      %c0_62 = arith.constant 0 : index
      %86 = vector.load %arg10[%c0_61, %c0_62] : memref<8x1xf32, #tpu.memory_space<vmem>>, vector<8x1xf32>
      tpu.vector_store %arg10[%c0_61, %c0_62], %40 {strides = array<i32>} : memref<8x1xf32, #tpu.memory_space<vmem>>, vector<8x1xf32>,
    } else {
    }
    %c0_i32_18 = arith.constant 0 : i32
    %25 = arith.cmpi eq, %arg2, %c0_i32_18 : i32
    %c0_i32_19 = arith.constant 0 : i32
    %26 = arith.cmpi eq, %arg3, %c0_i32_19 : i32
    %27 = arith.andi %25, %26 : i1
    %28 = arith.extui %27 : i1 to i32
    %c0_i32_20 = arith.constant 0 : i32
    %29 = arith.cmpi ne, %28, %c0_i32_20 : i32
    scf.if %29 {
      %c0_21 = arith.constant 0 : index
      %c0_22 = arith.constant 0 : index
      %c0_23 = arith.constant 0 : index
      %30 = vector.load %arg7[%c0_21, %c0_22, %c0_23] : memref<1x1x1xf32, #tpu.memory_space<vmem>>, vector<1x1x1xf32>
      %c0_24 = arith.constant 0 : index
      %c0_25 = arith.constant 0 : index
      %31 = vector.load %arg12[%c0_24, %c0_25] : memref<8x1xf32, #tpu.memory_space<vmem>>, vector<8x1xf32>
      %32 = math.log %31 : vector<8x1xf32>
      %c0_26 = arith.constant 0 : index
      %c0_27 = arith.constant 0 : index
      %33 = vector.load %arg13[%c0_26, %c0_27] : memref<8x1xf32, #tpu.memory_space<vmem>>, vector<8x1xf32>
      %cst_28 = arith.constant 5.000000e-01 : f32
      %34 = vector.broadcast %cst_28 : f32 to vector<8x1xf32>
      %35 = arith.mulf %34, %33 : vector<8x1xf32>
      %c0_29 = arith.constant 0 : index
      %c0_30 = arith.constant 0 : index
      %36 = vector.load %arg11[%c0_29, %c0_30] : memref<8x1xf32, #tpu.memory_space<vmem>>, vector<8x1xf32>
      %37 = tpu.reciprocal %36 : vector<8x1xf32> -> vector<8x1xf32>
      %38 = arith.mulf %35, %37 : vector<8x1xf32>
      %39 = arith.subf %32, %38 : vector<8x1xf32>
      %40 = vector.shape_cast %39 : vector<8x1xf32> to vector<1x8x1xf32>
      %cst_31 = arith.constant dense<0.000000e+00> : vector<1xf32>
      %41 = vector.multi_reduction <add>, %40, %cst_31 [1, 2] : vector<1x8x1xf32> to vector<1xf32>
      %42 = vector.shape_cast %41 : vector<1xf32> to vector<1x1x1xf32>
      %43 = vector.extract %42[0, 0, 0] : f32 from vector<1x1x1xf32>
      %44 = vector.broadcast %43 : f32 to vector<1x1x1xf32>
      %45 = arith.addf %30, %44 : vector<1x1x1xf32>
      %c0_32 = arith.constant 0 : index
      %c0_33 = arith.constant 0 : index
      %c0_34 = arith.constant 0 : index
      %46 = vector.load %arg7[%c0_32, %c0_33, %c0_34] : memref<1x1x1xf32, #tpu.memory_space<vmem>>, vector<1x1x1xf32>
      tpu.vector_store %arg7[%c0_32, %c0_33, %c0_34], %45 {strides = array<i32>} : memref<1x1x1xf32, #tpu.memory_space<vmem>>, vector<1x1x1xf32>,
    } else {
    }
    return
  }
  func.func @transform_0(%arg0: i32, %arg1: i32, %arg2: i32, %arg3: i32) -> (i32, i32, i32) {
    %c0_i32 = arith.constant 0 : i32
    return %arg0, %arg3, %arg2 : i32, i32, i32
  }
  func.func @transform_1(%arg0: i32, %arg1: i32, %arg2: i32, %arg3: i32) -> (i32, i32) {
    %c0_i32 = arith.constant 0 : i32
    return %arg1, %arg3 : i32, i32
  }
  func.func @transform_2(%arg0: i32, %arg1: i32, %arg2: i32, %arg3: i32) -> (i32, i32, i32) {
    %c0_i32 = arith.constant 0 : i32
    return %arg0, %arg1, %arg2 : i32, i32, i32
  }
  func.func @transform_3(%arg0: i32, %arg1: i32, %arg2: i32, %arg3: i32) -> (i32, i32, i32) {
    %c0_i32 = arith.constant 0 : i32
    %c0_i32_0 = arith.constant 0 : i32
    %c0_i32_1 = arith.constant 0 : i32
    return %arg0, %c0_i32, %c0_i32_0 : i32, i32, i32
  }
}

</mosaic_0001>

<llo_original>
// kernel: tpu_custom_call.1
$region0: #{tpu_custom_call.1}
  #allocation0 [shape = 'u32[]', space=smem, size = 0x4, offset = 0x4, fixed_abs, tag = 'smem constant byte address 0x4 - core index']
  #allocation1 [shape = 'u32[72,128]{1,0:T(1,128)}', space=vmem, size = 0x9000, scoped, tag = 'internal scratch']
  #allocation2 [shape = 'f32[8,256]{1,0:T(8,128)}', space=vmem, size = 0x2000, scoped, tag = 'scratch operand']
  #allocation3 [shape = 'f32[8,1]{1,0:T(8,128)}', space=vmem, size = 0x1000, scoped, tag = 'scratch operand']
  #allocation4 [shape = 'f32[8,1]{1,0:T(8,128)}', space=vmem, size = 0x1000, scoped, tag = 'scratch operand']
  #allocation5 [shape = 'f32[8,1]{1,0:T(8,128)}', space=vmem, size = 0x1000, scoped, tag = 'scratch operand']
  #allocation6 [shape = 'f32[8,1]{1,0:T(8,128)}', space=vmem, size = 0x1000, scoped, tag = 'scratch operand']
  #allocation7 [shape = 'f32[8,1]{1,0:T(8,128)}', space=vmem, size = 0x1000, scoped, tag = 'scratch operand']
  %s0 = inlined_call_operand.hbm [shape: f32[2,4,256], index: 0, kind: input, shape index: {}]
  %s1 = inlined_call_operand.vmem [shape: f32[8,4], index: 1, kind: input, shape index: {}]
  %s2 = inlined_call_operand.hbm [shape: f32[2,8,256], index: 2, kind: input, shape index: {}]
  %s3 = inlined_call_operand.vmem [shape: f32[2,1,1], index: 3, kind: output, shape index: {}]
  %s4 = sld [smem:[#allocation0]]
  $region73: #{tpu_custom_call.1} parent=0
    _
  %s6 = ssub.s32 1, %s4
  %s7 = scalar_select 0, %s6, %s4
  $region1: #{tpu_custom_call.1} parent=0
    #allocation8 [shape = 'u8[8192]{0}', space=vmem, size = 0x2000, scoped, tag = 'input window, operand 0']
    #allocation9 [shape = 's32[2]{0}', space=sflag, size = 0x8, scoped, tag = 'scoped memory for tpu_custom_call.1']
    #allocation10 [shape = 'u8[16384]{0}', space=vmem, size = 0x4000, scoped, tag = 'input window, operand 2']
    #allocation11 [shape = 's32[2]{0}', space=sflag, size = 0x8, scoped, tag = 'scoped memory for tpu_custom_call.1']
    %8 = vsyncpa [#allocation9], 0
    %s9 = scalar_lea.sflag [#allocation9], 1
    %10 = vsyncpa %s9, 0
    %11 = vsyncpa [#allocation11], 0
    %s12 = scalar_lea.sflag [#allocation11], 1
    %13 = vsyncpa %s12, 0
    loop: start=0, step=1, limit=4
    $region2: #{tpu_custom_call.1} parent=1 // loop_pre_header
      _
    $region3: #{tpu_custom_call.1} parent=1 // loop_header
      %s15 = sphi 0, %s19
      %p16 = scmp.ge.s32.totalorder %s15, 4
      %s22 = sphi 0, %s48
      %s23 = sphi 0, %s44
      %s24 = sphi 0, %s40
      %s25 = sphi 0, %s36
      %s26 = sphi 0, %s22
      %s27 = sphi 0, %s23
      %s28 = sphi 0, %s24
      %s29 = sphi 0, %s25
      %s30 = sphi 0, %s26
      %s31 = sphi 0, %s27
      %s32 = sphi 0, %s28
      %s33 = sphi 0, %s29
      %s55 = sphi 0, %s57
      %s58 = sphi 0, %s55
      %s59 = sphi 0, %s58
      %s75 = sphi 0, %s59
      %s83 = sphi 0, %s85
      %s86 = sphi 0, %s83
      %s87 = sphi 0, %s86
      %s103 = sphi 0, %s87
      %s113 = sphi 0, %s115
      %s116 = sphi 0, %s113
      %s117 = sphi 0, %s116
      %s133 = sphi 0, %s117
      %s139 = sphi 0, %s141
      %s142 = sphi 0, %s139
      %s143 = sphi 0, %s142
      %s159 = sphi 0, %s143
    $region4: #{tpu_custom_call.1} parent=1 // loop_header_branch
      %18 = sbr.rel (%p16) target = $region8
    $region5: #{tpu_custom_call.1} parent=1 // loop_body
      %s20 = ssub.s32 %s15, 1
      %s21 = ssub.s32 %s15, 2
      %s34 = sadd.s32 1, %s25
      %p35 = scmp.ge.s32.totalorder %s34, 1
      %s36 = scalar_select %p35, 0, %s34
      %s37 = sadd.s32 1, %s24
      %s38 = scalar_select %p35, %s37, %s24
      %p39 = scmp.ge.s32.totalorder %s38, 1
      %s40 = scalar_select %p39, 0, %s38
      %s41 = sadd.s32 1, %s23
      %s42 = scalar_select %p39, %s41, %s23
      %p43 = scmp.ge.s32.totalorder %s42, 1
      %s44 = scalar_select %p43, 0, %s42
      %s45 = sadd.s32 1, %s22
      %s46 = scalar_select %p43, %s45, %s22
      %p47 = scmp.ge.s32.totalorder %s46, 2
      %s48 = scalar_select %p47, 0, %s46
      %s49 = ssub.s32 %s22, %s48
      %s50 = ssub.s32 %s25, %s36
      %s51 = sor.u32 %s49, %s50
      %s52 = ssub.s32 %s24, %s40
      %s53 = sor.u32 %s51, %s52
      %p54 = scmp.eq.s32.totalorder %s53, 0
      %s56 = sadd.s32 %s55, 1
      %s57 = scalar_select %p54, %s55, %s56
      %p60 = pneg %p54
      %p61 = scmp.eq.s32.totalorder %s15, 1
      %p62 = por %p60, %p61
      %p63 = scmp.ne.s32.totalorder %s55, %s58
      %p64 = scmp.eq.s32.totalorder %s15, 0
      %p65 = por %p63, %p64
      %p66 = scmp.ne.s32.totalorder %s55, %s58
      %p67 = scmp.eq.s32.totalorder %s20, 1
      %p68 = por %p66, %p67
      %p69 = scmp.ne.s32.totalorder %s58, %s59
      %p70 = scmp.eq.s32.totalorder %s20, 0
      %p71 = por %p69, %p70
      %p72 = scmp.ne.s32.totalorder %s58, %s59
      %p73 = scmp.eq.s32.totalorder %s21, 1
      %p74 = por %p72, %p73
      %p76 = scmp.ne.s32.totalorder %s59, %s75
      %p77 = scmp.eq.s32.totalorder %s21, 0
      %p78 = por %p76, %p77
      %s79 = ssub.s32 %s23, %s44
      %s80 = ssub.s32 %s25, %s36
      %s81 = sor.u32 %s79, %s80
      %p82 = scmp.eq.s32.totalorder %s81, 0
      %s84 = sadd.s32 %s83, 1
      %s85 = scalar_select %p82, %s83, %s84
      %p88 = pneg %p82
      %p89 = scmp.eq.s32.totalorder %s15, 1
      %p90 = por %p88, %p89
      %p91 = scmp.ne.s32.totalorder %s83, %s86
      %p92 = scmp.eq.s32.totalorder %s15, 0
      %p93 = por %p91, %p92
      %p94 = scmp.ne.s32.totalorder %s83, %s86
      %p95 = scmp.eq.s32.totalorder %s20, 1
      %p96 = por %p94, %p95
      %p97 = scmp.ne.s32.totalorder %s86, %s87
      %p98 = scmp.eq.s32.totalorder %s20, 0
      %p99 = por %p97, %p98
      %p100 = scmp.ne.s32.totalorder %s86, %s87
      %p101 = scmp.eq.s32.totalorder %s21, 1
      %p102 = por %p100, %p101
      %p104 = scmp.ne.s32.totalorder %s87, %s103
      %p105 = scmp.eq.s32.totalorder %s21, 0
      %p106 = por %p104, %p105
      %s107 = ssub.s32 %s22, %s48
      %s108 = ssub.s32 %s23, %s44
      %s109 = sor.u32 %s107, %s108
      %s110 = ssub.s32 %s24, %s40
      %s111 = sor.u32 %s109, %s110
      %p112 = scmp.eq.s32.totalorder %s111, 0
      %s114 = sadd.s32 %s113, 1
      %s115 = scalar_select %p112, %s113, %s114
      %p118 = pneg %p112
      %p119 = scmp.eq.s32.totalorder %s15, 1
      %p120 = por %p118, %p119
      %p121 = scmp.ne.s32.totalorder %s113, %s116
      %p122 = scmp.eq.s32.totalorder %s15, 0
      %p123 = por %p121, %p122
      %p124 = scmp.ne.s32.totalorder %s113, %s116
      %p125 = scmp.eq.s32.totalorder %s20, 1
      %p126 = por %p124, %p125
      %p127 = scmp.ne.s32.totalorder %s116, %s117
      %p128 = scmp.eq.s32.totalorder %s20, 0
      %p129 = por %p127, %p128
      %p130 = scmp.ne.s32.totalorder %s116, %s117
      %p131 = scmp.eq.s32.totalorder %s21, 1
      %p132 = por %p130, %p131
      %p134 = scmp.ne.s32.totalorder %s117, %s133
      %p135 = scmp.eq.s32.totalorder %s21, 0
      %p136 = por %p134, %p135
      %s137 = ssub.s32 %s22, %s48
      %p138 = scmp.eq.s32.totalorder %s137, 0
      %s140 = sadd.s32 %s139, 1
      %s141 = scalar_select %p138, %s139, %s140
      %p144 = pneg %p138
      %p145 = scmp.eq.s32.totalorder %s15, 1
      %p146 = por %p144, %p145
      %p147 = scmp.ne.s32.totalorder %s139, %s142
      %p148 = scmp.eq.s32.totalorder %s15, 0
      %p149 = por %p147, %p148
      %p150 = scmp.ne.s32.totalorder %s139, %s142
      %p151 = scmp.eq.s32.totalorder %s20, 1
      %p152 = por %p150, %p151
      %p153 = scmp.ne.s32.totalorder %s142, %s143
      %p154 = scmp.eq.s32.totalorder %s20, 0
      %p155 = por %p153, %p154
      %p156 = scmp.ne.s32.totalorder %s142, %s143
      %p157 = scmp.eq.s32.totalorder %s21, 1
      %p158 = por %p156, %p157
      %p160 = scmp.ne.s32.totalorder %s143, %s159
      %p161 = scmp.eq.s32.totalorder %s21, 0
      %p162 = por %p160, %p161
      %p163 = scmp.le.s32.totalorder 1, %s15
      %p164 = scmp.lt.s32.totalorder %s15, 3
      %p165 = pnand %p163, %p164
      %p166 = pneg %p165
      // Predicated region
      $region9: #{tpu_custom_call.1} parent=5 // pred_check
        _
      $region10: #{tpu_custom_call.1} parent=5 // pred_check_branch
        %168 = sbr.rel (%p165) target = $region12
      $region11: #{tpu_custom_call.1} parent=5 // pred_region
        %s169 = ssub.s32 %s15, 1
        // Predicated region
        $region13: #{tpu_custom_call.1} parent=11 // pred_check
          %p170 = pneg %p99
        $region14: #{tpu_custom_call.1} parent=11 // pred_check_branch
          %172 = sbr.rel (%p170) target = $region16
        $region15: #{tpu_custom_call.1} parent=11 // pred_region
          %p173 = scmp.lt.s32.totalorder %s27, 0
          %s174 = scalar_select %p173, %s27, 0
          %p175 = scmp.lt.s32.totalorder %s29, 0
          %s176 = scalar_select %p175, %s29, 0
          %s177 = sadd.s32 %s176, %s174
          %s178 = smul.addr %s177, 8
          %s179 = scalar_lea.vmem %s1, %s178
        $region16: #{tpu_custom_call.1} parent=11 // pred_fallthru
          _
      $region12: #{tpu_custom_call.1} parent=5 // pred_fallthru
        _
      %p180 = scmp.lt.s32.totalorder %s15, 2
      // Predicated region
      $region17: #{tpu_custom_call.1} parent=5 // pred_check
        %p181 = pneg %p180
      $region18: #{tpu_custom_call.1} parent=5 // pred_check_branch
        %183 = sbr.rel (%p181) target = $region20
      $region19: #{tpu_custom_call.1} parent=5 // pred_region
        // Predicated region
        $region21: #{tpu_custom_call.1} parent=19 // pred_check
          %p184 = pneg %p65
        $region22: #{tpu_custom_call.1} parent=19 // pred_check_branch
          %186 = sbr.rel (%p184) target = $region24
        $region23: #{tpu_custom_call.1} parent=19 // pred_region
          %s187 = sand.u32 %s55, 1
          %s188 = scalar_lea.sflag [#allocation9], %s187
          %s189 = sand.u32 %s55, 1
          %s190 = smul.addr %s189, 8
          %s191 = scalar_lea.vmem [#allocation8], %s190
          %s192 = smul.u32 2, %s24
          %194 = vsyncadd %s188, 0
          %s195 = smul.addr %s25, 2
          %s196 = sadd.s32 %s192, %s195
          %s197 = smul.addr %s22, 2
          %s198 = sadd.s32 %s196, %s197
          %s199 = smul.addr %s198, 4
          %s200 = scalar_lea.hbm %s0, %s199
          %s202 = sshll.u32 %s200, 4
          %s203 = int_to_ptr.hbm [resolvable:$true] %s202
          %s204 = sshll.u32 %s191, 4
          %s205 = int_to_ptr.vmem [resolvable:$true] %s204
          %207 = dma.hbm_to_vmem [thread:$0]  %s203, 128, %s205, %s188
        $region24: #{tpu_custom_call.1} parent=19 // pred_fallthru
          _
        // Predicated region
        $region25: #{tpu_custom_call.1} parent=19 // pred_check
          %p208 = pneg %p123
        $region26: #{tpu_custom_call.1} parent=19 // pred_check_branch
          %210 = sbr.rel (%p208) target = $region28
        $region27: #{tpu_custom_call.1} parent=19 // pred_region
          %s211 = sand.u32 %s113, 1
          %s212 = scalar_lea.sflag [#allocation11], %s211
          %s213 = sand.u32 %s113, 1
          %s214 = smul.addr %s213, 16
          %s215 = scalar_lea.vmem [#allocation10], %s214
          %s216 = smul.u32 2, %s24
          %218 = vsyncadd %s212, 0
          %s219 = smul.addr %s23, 2
          %s220 = sadd.s32 %s216, %s219
          %s221 = smul.addr %s22, 2
          %s222 = sadd.s32 %s220, %s221
          %s223 = smul.addr %s222, 8
          %s224 = scalar_lea.hbm %s2, %s223
          %s226 = sshll.u32 %s224, 4
          %s227 = int_to_ptr.hbm [resolvable:$true] %s226
          %s228 = sshll.u32 %s215, 4
          %s229 = int_to_ptr.vmem [resolvable:$true] %s228
          %231 = dma.hbm_to_vmem [thread:$0]  %s227, 256, %s229, %s212
        $region28: #{tpu_custom_call.1} parent=19 // pred_fallthru
          _
      $region20: #{tpu_custom_call.1} parent=5 // pred_fallthru
        _
      %p232 = scmp.le.s32.totalorder 1, %s15
      %p233 = scmp.lt.s32.totalorder %s15, 3
      %p234 = pnand %p232, %p233
      %p235 = pneg %p234
      // Predicated region
      $region29: #{tpu_custom_call.1} parent=5 // pred_check
        _
      $region30: #{tpu_custom_call.1} parent=5 // pred_check_branch
        %237 = sbr.rel (%p234) target = $region32
      $region31: #{tpu_custom_call.1} parent=5 // pred_region
        %s238 = ssub.s32 %s15, 1
        %s239 = sand.u32 %s58, 1
        %s240 = scalar_lea.sflag [#allocation9], %s239
        %s241 = sand.u32 %s58, 1
        %s242 = smul.addr %s241, 8
        %s243 = scalar_lea.vmem [#allocation8], %s242
        // Predicated region
        $region33: #{tpu_custom_call.1} parent=31 // pred_check
          %p244 = pneg %p71
        $region34: #{tpu_custom_call.1} parent=31 // pred_check_branch
          %246 = sbr.rel (%p244) target = $region36
        $region35: #{tpu_custom_call.1} parent=31 // pred_region
          %248 = dma.done %s240, 128
        $region36: #{tpu_custom_call.1} parent=31 // pred_fallthru
          _
        %s249 = sand.u32 %s116, 1
        %s250 = scalar_lea.sflag [#allocation11], %s249
        %s251 = sand.u32 %s116, 1
        %s252 = smul.addr %s251, 16
        %s253 = scalar_lea.vmem [#allocation10], %s252
        // Predicated region
        $region37: #{tpu_custom_call.1} parent=31 // pred_check
          %p254 = pneg %p129
        $region38: #{tpu_custom_call.1} parent=31 // pred_check_branch
          %256 = sbr.rel (%p254) target = $region40
        $region39: #{tpu_custom_call.1} parent=31 // pred_region
          %258 = dma.done %s250, 256
        $region40: #{tpu_custom_call.1} parent=31 // pred_fallthru
          _
        %s259 = sand.u32 %s58, 1
        %s260 = scalar_lea.sflag [#allocation9], %s259
        %s261 = sand.u32 %s58, 1
        %s262 = smul.addr %s261, 8
        %s263 = scalar_lea.vmem [#allocation8], %s262
        %p264 = pneg %p71
        %p265 = pneg %p68
        %p266 = scmp.lt.s32.totalorder %s27, 0
        %s267 = scalar_select %p266, %s27, 0
        %p268 = scmp.lt.s32.totalorder %s29, 0
        %s269 = scalar_select %p268, %s29, 0
        %s270 = sadd.s32 %s269, %s267
        %s271 = smul.addr %s270, 8
        %s272 = scalar_lea.vmem %s1, %s271
        %p273 = pneg %p99
        %p274 = pneg %p96
        %s275 = sand.u32 %s116, 1
        %s276 = scalar_lea.sflag [#allocation11], %s275
        %s277 = sand.u32 %s116, 1
        %s278 = smul.addr %s277, 16
        %s279 = scalar_lea.vmem [#allocation10], %s278
        %p280 = pneg %p129
        %p281 = pneg %p126
        %p282 = pneg %p155
        %p283 = pneg %p152
        %p284 = scmp.lt.s32.totalorder %s26, 1
        %s285 = scalar_select %p284, %s26, 1
        %s286 = scalar_lea.vmem %s3, %s285
        %s287 = smul.u32 2, %s28
        %p288 = scmp.lt.s32.totalorder %s27, 0
        %s289 = scalar_select %p288, %s27, 0
        %p290 = scmp.lt.s32.totalorder %s29, 0
        %s291 = scalar_select %p290, %s29, 0
        %s292 = sadd.s32 %s291, %s289
        %s293 = smul.addr %s292, 8
        %s294 = scalar_lea.vmem %s1, %s293
        %s295 = smul.u32 2, %s28
        %p296 = scmp.lt.s32.totalorder %s26, 1
        %s297 = scalar_select %p296, %s26, 1
        %s298 = scalar_lea.vmem %s3, %s297
        %p299 = scmp.eq.s32.totalorder %s27, 0
        %p300 = scmp.eq.s32.totalorder %s28, 0
        %p301 = pnand %p299, %p300
        %p302 = pneg %p301
        %p303 = scmp.eq.s32.totalorder %s29, 0
        %p304 = pnand %p302, %p303
        %p305 = pneg %p304
        // Predicated region
        $region41: #{tpu_custom_call.1} parent=31 // pred_check
          _
        $region42: #{tpu_custom_call.1} parent=31 // pred_check_branch
          %307 = sbr.rel (%p304) target = $region44
        $region43: #{tpu_custom_call.1} parent=31 // pred_region
          %vm308 = vcmask 0
          %309 = vst.msk [vmem:[%s298] sm:$0x1] %vm308, 0.0
        $region44: #{tpu_custom_call.1} parent=31 // pred_fallthru
          _
        %p310 = pnand %p300, %p303
        %p311 = pneg %p310
        // Predicated region
        $region45: #{tpu_custom_call.1} parent=31 // pred_check
          _
        $region46: #{tpu_custom_call.1} parent=31 // pred_check_branch
          %313 = sbr.rel (%p310) target = $region48
        $region47: #{tpu_custom_call.1} parent=31 // pred_region
          %vm314 = vcmask 7168
          %315 = vst.msk [vmem:[#allocation3] sm:$0xff] %vm314, -1e+30
          %316 = vst.msk [vmem:[#allocation4] sm:$0xff] %vm314, -1e+30
          %317 = vst.msk [vmem:[#allocation5] sm:$0xff] %vm314, 0.0
          %318 = vst.msk [vmem:[#allocation6] sm:$0xff] %vm314, 0.0
          %319 = vst.msk [vmem:[#allocation7] sm:$0xff] %vm314, 0.0
        $region48: #{tpu_custom_call.1} parent=31 // pred_fallthru
          _
        // Predicated region
        $region49: #{tpu_custom_call.1} parent=31 // pred_check
          %p320 = pneg %p303
        $region50: #{tpu_custom_call.1} parent=31 // pred_check_branch
          %322 = sbr.rel (%p320) target = $region52
        $region51: #{tpu_custom_call.1} parent=31 // pred_region
          %323 = vst [vmem:[#allocation2] sm:$0xff] 0.0
          %324 = vst [vmem:[#allocation2 + $0x8] sm:$0xff] 0.0
        $region52: #{tpu_custom_call.1} parent=31 // pred_fallthru
          _
        %v325 = vld [vmem:[#allocation2] sm:$0xff]
        %v326 = vld [vmem:[#allocation2 + $0x8] sm:$0xff]
        %v327 = vld [vmem:[%s294] sm:$0xff]
        %v328 = vld [vmem:[%s243] sm:$0xff]
        %330 = vst [vmem:[#allocation1] ss:$2 sm:$0xff] %v328
        %v331 = vld.sshfl [vmem:[#allocation1] sm:$0xff pattern:$0x75316420]
        %v332 = vld.sshfl [vmem:[#allocation1 + $0x8] sm:$0xff pattern:$0x75316420]
        %vm333 = vcmask 31744
        %v335 = vsel %vm333, %v327, 0
        %vm337 = vcmask 1043456
        %v338 = vsel %vm337, %v331, 0
        %v340 = vsel %vm337, %v332, 0
        %342 = vmatpush.msra.mxu0 0.0
        %343 = vmatpush.msra.mxu0 0.0
        %344 = vmatpush.msra.mxu0 0.0
        %345 = vmatpush.msra.mxu0 0.0
        %346 = vmatpush.msra.mxu0 0.0
        %347 = vmatpush.msra.mxu0 0.0
        %348 = vmatpush.msra.mxu0 0.0
        %349 = vmatpush.msra.mxu0 0.0
        %350 = vmatpush.msra.mxu0 0.0
        %351 = vmatpush.msra.mxu0 0.0
        %352 = vmatpush.msra.mxu0 0.0
        %353 = vmatpush.msra.mxu0 0.0
        %354 = vmatpush.msra.mxu0 0.0
        %355 = vmatpush.msra.mxu0 0.0
        %356 = vmatpush.msra.mxu0 0.0
        %357 = vmatpush.msra.mxu0 %v338
        %358 = vmatmul.f32.gmra.mxu0 %v335
        %v359 = vpop.f32.mrf.mxu0
        %v360 = vadd.f32 0.0, %v359
        %361 = vdwg.mxu0
        %362 = vmatpush.msra.mxu0 0.0
        %363 = vmatpush.msra.mxu0 0.0
        %364 = vmatpush.msra.mxu0 0.0
        %365 = vmatpush.msra.mxu0 0.0
        %366 = vmatpush.msra.mxu0 0.0
        %367 = vmatpush.msra.mxu0 0.0
        %368 = vmatpush.msra.mxu0 0.0
        %369 = vmatpush.msra.mxu0 0.0
        %370 = vmatpush.msra.mxu0 0.0
        %371 = vmatpush.msra.mxu0 0.0
        %372 = vmatpush.msra.mxu0 0.0
        %373 = vmatpush.msra.mxu0 0.0
        %374 = vmatpush.msra.mxu0 0.0
        %375 = vmatpush.msra.mxu0 0.0
        %376 = vmatpush.msra.mxu0 0.0
        %377 = vmatpush.msra.mxu0 %v340
        %378 = vmatmul.f32.gmra.mxu0 %v335
        %v379 = vpop.f32.mrf.mxu0
        %v380 = vadd.f32 0.0, %v379
        %381 = vdwg.mxu0
        %v382 = vadd.f32 %v325, %v360
        %v383 = vadd.f32 %v326, %v380
        %384 = vst [vmem:[#allocation2] sm:$0xff] %v382
        %385 = vst [vmem:[#allocation2 + $0x8] sm:$0xff] %v383
        // Predicated region
        $region53: #{tpu_custom_call.1} parent=31 // pred_check
          %p386 = pneg %p303
        $region54: #{tpu_custom_call.1} parent=31 // pred_check_branch
          %388 = sbr.rel (%p386) target = $region56
        $region55: #{tpu_custom_call.1} parent=31 // pred_region
          %v389 = vld [vmem:[%s253] sm:$0xff]
          %v390 = vld [vmem:[%s253 + $0x8] sm:$0xff]
          %v391 = vld [vmem:[#allocation2] sm:$0xff]
          %v392 = vld [vmem:[#allocation2 + $0x8] sm:$0xff]
          %v393 = vmax.f32 %v389, %v390
          %394 = vmax.xlane.f32.xlu0 %v393
          %v395 = vpop.xlane.xlu0 %394
          %v396 = vmax.f32 %v391, %v392
          %397 = vmax.xlane.f32.xlu0 %v396
          %v398 = vpop.xlane.xlu0 %397
          %v399 = vld [vmem:[#allocation3] sm:$0xff]
          %v400 = vmax.f32 %v399, %v395
          %v401 = vld [vmem:[#allocation4] sm:$0xff]
          %v402 = vmax.f32 %v401, %v398
          %v403 = vsub.f32 %v399, %v400
          %v404 = vmul.f32 %v403, 0.5
          %v405 = vmul.f32 %v404, 1.442695
          %v406 = vpow.pop %v405
          %v407 = vsub.f32 %v401, %v402
          %v408 = vmul.f32 %v407, 0.5
          %v409 = vmul.f32 %v408, 1.442695
          %v410 = vpow.pop %v409
          %412 = vset.pattern.permute.xlu0 0
          %413 = vperm.xlu0 %412, %v400
          %v414 = vpop.permute.xlu0 %413
          %v416 = vsub.f32 %v389, %v414
          %v417 = vsub.f32 %v390, %v414
          %v418 = vmul.f32 %v416, 0.5
          %v419 = vmul.f32 %v417, 0.5
          %v420 = vmul.f32 %v418, 1.442695
          %v421 = vpow.pop %v420
          %v422 = vmul.f32 %v419, 1.442695
          %v423 = vpow.pop %v422
          %425 = vset.pattern.permute.xlu0 0
          %426 = vperm.xlu0 %425, %v402
          %v427 = vpop.permute.xlu0 %426
          %v429 = vsub.f32 %v391, %v427
          %v430 = vsub.f32 %v392, %v427
          %v431 = vmul.f32 %v429, 0.5
          %v432 = vmul.f32 %v430, 0.5
          %v433 = vmul.f32 %v431, 1.442695
          %v434 = vpow.pop %v433
          %v435 = vmul.f32 %v432, 1.442695
          %v436 = vpow.pop %v435
          %v437 = vld [vmem:[#allocation7] sm:$0xff]
          %v438 = vld [vmem:[#allocation5] sm:$0xff]
          %v439 = vmul.f32 %v407, %v438
          %v440 = vadd.f32 %v437, %v439
          %v441 = vmul.f32 %v406, %v440
          %v442 = vmul.f32 %v421, %v429
          %v443 = vmul.f32 %v423, %v430
          %v444 = vadd.f32 %v442, %v443
          %445 = vadd.xlane.f32.xlu0 %v444
          %v446 = vpop.xlane.xlu0 %445
          %v447 = vadd.f32 %v441, %v446
          %vm448 = vcmask 7168
          %449 = vst.msk [vmem:[#allocation7] sm:$0xff] %vm448, %v447
          %v450 = vld [vmem:[#allocation5] sm:$0xff]
          %v451 = vmul.f32 %v406, %v450
          %v452 = vadd.f32 %v421, %v423
          %453 = vadd.xlane.f32.xlu0 %v452
          %v454 = vpop.xlane.xlu0 %453
          %v455 = vadd.f32 %v451, %v454
          %456 = vst.msk [vmem:[#allocation5] sm:$0xff] %vm448, %v455
          %v457 = vld [vmem:[#allocation6] sm:$0xff]
          %v458 = vmul.f32 %v410, %v457
          %v459 = vadd.f32 %v434, %v436
          %460 = vadd.xlane.f32.xlu0 %v459
          %v461 = vpop.xlane.xlu0 %460
          %v462 = vadd.f32 %v458, %v461
          %463 = vst.msk [vmem:[#allocation6] sm:$0xff] %vm448, %v462
          %464 = vst.msk [vmem:[#allocation3] sm:$0xff] %vm448, %v400
          %465 = vst.msk [vmem:[#allocation4] sm:$0xff] %vm448, %v402
        $region56: #{tpu_custom_call.1} parent=31 // pred_fallthru
          _
        // Predicated region
        $region57: #{tpu_custom_call.1} parent=31 // pred_check
          _
        $region58: #{tpu_custom_call.1} parent=31 // pred_check_branch
          %467 = sbr.rel (%p310) target = $region60
        $region59: #{tpu_custom_call.1} parent=31 // pred_region
          %v468 = vld [vmem:[%s298] sm:$0x1]
          %v469 = vld [vmem:[#allocation6] sm:$0xff]
          %v470 = vlog2.pop %v469
          %v471 = vmul.f32 %v470, 0.6931472
          %v472 = vld [vmem:[#allocation7] sm:$0xff]
          %v473 = vmul.f32 %v472, 0.5
          %v474 = vld [vmem:[#allocation5] sm:$0xff]
          %v475 = vrcp.pop %v474
          %v476 = vmul.f32 %v474, %v475
          %v477 = vsub.f32 1.0, %v476
          %v478 = vmul.f32 %v475, %v477
          %v479 = vadd.f32 %v475, %v478
          %vm480 = vweird.f32 %v474
          %vm481 = vweird.f32 %v475
          %vm482 = vmor %vm480, %vm481
          %v483 = vsel %vm482, %v475, %v479
          %v484 = vand.u32 2147483647, %v474
          %vm485 = vcmp.eq.f32.partialorder %v484, 8.507059e+37
          %v486 = vand.u32 %v474, 2147483648
          %v487 = vor.u32 1.1754944e-38, %v486
          %v488 = vsel %vm485, %v487, %v483
          %v489 = vmul.f32 %v473, %v488
          %v490 = vsub.f32 %v471, %v489
          %vm491 = vcmask 7168
          %v492 = vsel %vm491, %v490, 0.0
          %493 = vadd.xlane.f32.xlu0 %v492
          %v494 = vpop.xlane.xlu0 %493
          %v495 = vrot.slane %v494, 4
          %v496 = vadd.f32 %v494, %v495
          %v497 = vrot.slane %v496, 2
          %v498 = vadd.f32 %v496, %v497
          %v499 = vrot.slane %v498, 1
          %v500 = vadd.f32 %v498, %v499
          %s501 = vtos %v500
          %v502 = vstv %s501
          %v503 = vadd.f32 %v468, %v502
          %vm504 = vcmask 0
          %505 = vst.msk [vmem:[%s298] sm:$0x1] %vm504, %v503
        $region60: #{tpu_custom_call.1} parent=31 // pred_fallthru
          _
        %p506 = scmp.lt.s32.totalorder %s26, 1
        %s507 = scalar_select %p506, %s26, 1
        %s508 = scalar_lea.vmem %s3, %s507
        // Predicated region
        $region61: #{tpu_custom_call.1} parent=31 // pred_check
          %p509 = pneg %p152
        $region62: #{tpu_custom_call.1} parent=31 // pred_check_branch
          %511 = sbr.rel (%p509) target = $region64
        $region63: #{tpu_custom_call.1} parent=31 // pred_region
          _
        $region64: #{tpu_custom_call.1} parent=31 // pred_fallthru
          _
      $region32: #{tpu_custom_call.1} parent=5 // pred_fallthru
        _
      %p512 = scmp.le.s32.totalorder 2, %s15
      // Predicated region
      $region65: #{tpu_custom_call.1} parent=5 // pred_check
        %p513 = pneg %p512
      $region66: #{tpu_custom_call.1} parent=5 // pred_check_branch
        %515 = sbr.rel (%p513) target = $region68
      $region67: #{tpu_custom_call.1} parent=5 // pred_region
        %s516 = ssub.s32 %s15, 2
        // Predicated region
        $region69: #{tpu_custom_call.1} parent=67 // pred_check
          %p517 = pneg %p158
        $region70: #{tpu_custom_call.1} parent=67 // pred_check_branch
          %519 = sbr.rel (%p517) target = $region72
        $region71: #{tpu_custom_call.1} parent=67 // pred_region
          %p520 = scmp.lt.s32.totalorder %s30, 1
          %s521 = scalar_select %p520, %s30, 1
          %s522 = scalar_lea.vmem %s3, %s521
        $region72: #{tpu_custom_call.1} parent=67 // pred_fallthru
          _
      $region68: #{tpu_custom_call.1} parent=5 // pred_fallthru
        _
    $region6: #{tpu_custom_call.1} parent=1 // loop_footer
      %s19 = sadd.s32 1, %s15
    $region7: #{tpu_custom_call.1} parent=1 // loop_footer_branch
      %14 = sbr.rel target = $region3
    $region8: #{tpu_custom_call.1} parent=1 // loop_exit
      _
    %523 = vsyncpa [#allocation9], 1
    %s524 = scalar_lea.sflag [#allocation9], 1
    %525 = vsyncpa %s524, 1
    %526 = vsyncpa [#allocation11], 1
    %s527 = scalar_lea.sflag [#allocation11], 1
    %528 = vsyncpa %s527, 1

</llo_original>
